<compile_context>
chip_gen: v7x
topology: tpu7x:2x2x1
jax: 0.10.0
libtpu: 0.0.40
codegen_flags: <defaults>
</compile_context>

<pallas_src>
import numpy as np
import jax
import jax.numpy as jnp
from jax.experimental import pallas as pl
from jax.experimental.pallas import tpu as pltpu  # noqa: F401  (TPU backend)

# Small, deterministic problem sizes (L chosen so LOUT = L + K - 1 = 128 is
# lane-aligned).
B, C, L, K = 2, 4, 121, 8
LOUT = L + K - 1              # 128
CHUNK = 16
assert LOUT % CHUNK == 0, "chunksum requires CHUNK | (L + K - 1)"
NCHUNK = LOUT // CHUNK        # 8
BC = B * C                    # 8 rows -> full f32 sublane occupancy

# Constant combined "shift (x) chunksum" matrix, built once on the host.
# For Y = sig @ A:
#   Y[r, k*NCHUNK + j] = sum_l sig[r, l] * [(l + k) lands in chunk j]
_l = np.arange(L)[:, None]                    # (L, 1)
_m = np.arange(K * NCHUNK)[None, :]           # (1, K*NCHUNK)
_A_HOST = (((_l + _m // NCHUNK) // CHUNK) == (_m % NCHUNK)).astype(np.float32)

# Constant tap-collapse matrix: out = (Y * resp_expanded) @ S where
#   S[m, j] = [m % NCHUNK == j]
_S_HOST = ((np.arange(K * NCHUNK)[:, None] % NCHUNK)
           == np.arange(NCHUNK)[None, :]).astype(np.float32)

# Device-resident constants created once; constant-folded under jit.
_A_DEV = jnp.asarray(_A_HOST)                 # (L, K*NCHUNK)
_S_DEV = jnp.asarray(_S_HOST)                 # (K*NCHUNK, NCHUNK)


def charge_kernel(sig_ref, a_ref, resp_ref, s_ref, out_ref):
    # sig_ref : (BC, L)          rastered charge, batch folded into rows
    # a_ref   : (L, K*NCHUNK)    constant shift(x)chunksum matrix
    # resp_ref: (BC, K*NCHUNK)   per-row response taps, lane-expanded
    # s_ref   : (K*NCHUNK, NCHUNK) constant tap-collapse matrix
    # out_ref : (BC, NCHUNK)
    sig = sig_ref[...]
    a = a_ref[...]
    resp = resp_ref[...]
    s = s_ref[...]

    # MXU matmul: shifted-and-chunked partial sums for every tap.
    y = jnp.dot(sig, a,
                preferred_element_type=jnp.float32,
                precision=jax.lax.Precision.HIGHEST)      # (BC, K*NCHUNK)

    # One elementwise vreg multiply + one tiny constant MXU matmul collapses
    # the K taps (no cross-lane slicing/broadcasting left in the kernel).
    out = jnp.dot(y * resp, s,
                  preferred_element_type=jnp.float32,
                  precision=jax.lax.Precision.HIGHEST)    # (BC, NCHUNK)

    out_ref[...] = out.astype(out_ref.dtype)


@jax.jit
def charge(signal, response):
    """signal: (B, C, L) f32, response: (C, K) f32 -> (B, C, NCHUNK) f32."""
    assert signal.shape == (B, C, L), f"expected {(B, C, L)}, got {signal.shape}"
    assert response.shape == (C, K), f"expected {(C, K)}, got {response.shape}"

    sig2d = signal.reshape(BC, L)                       # row r = b*C + c
    # (BC, K) -> lane-expanded (BC, K*NCHUNK); fuses with the tile under jit.
    resp_exp = jnp.repeat(jnp.tile(response, (B, 1)), NCHUNK, axis=1)

    out2d = pl.pallas_call(
        charge_kernel,
        out_shape=jax.ShapeDtypeStruct((BC, NCHUNK), signal.dtype),
        # No grid: all operands are whole-array VMEM blocks; avoids the
        # 1-step pipeline prologue/epilogue for a 64-element output.
    )(sig2d, _A_DEV, resp_exp, _S_DEV)

    return out2d.reshape(B, C, NCHUNK)


def reference(signal, response):
    sig = np.asarray(signal, np.float64)
    resp = np.asarray(response, np.float64)
    conv = np.zeros((B, C, LOUT), np.float64)
    for b in range(B):
        for c in range(C):
            conv[b, c] = np.convolve(sig[b, c], resp[c], mode="full")
    return conv.reshape(B, C, NCHUNK, CHUNK).sum(-1).astype(np.float32)


if __name__ == "__main__":
    key = jax.random.PRNGKey(0)
    k1, k2 = jax.random.split(key)
    signal = jax.random.normal(k1, (B, C, L), dtype=jnp.float32)
    response = jax.random.normal(k2, (C, K), dtype=jnp.float32)

    out = charge(signal, response)
    jax.block_until_ready(out)

    ref = reference(signal, response)
    np.testing.assert_allclose(np.asarray(out), ref, rtol=1e-4, atol=1e-4)
    print("KERNEL_OK")
</pallas_src>

<mosaic_0001>
module attributes {stable_mosaic.version = 11 : i64} {
  func.func @charge_kernel(%arg0: memref<8x121xf32, #tpu.memory_space<vmem>>, %arg1: memref<121x64xf32, #tpu.memory_space<vmem>>, %arg2: memref<8x64xf32, #tpu.memory_space<vmem>>, %arg3: memref<64x8xf32, #tpu.memory_space<vmem>>, %arg4: memref<8x8xf32, #tpu.memory_space<vmem>>) attributes {dimension_semantics = [], scalar_prefetch = 0 : i64, scratch_operands = 0 : i64, tpu.core_type = #tpu.core_type<tc>} {
    %c0 = arith.constant 0 : index
    %c0_0 = arith.constant 0 : index
    %0 = vector.load %arg0[%c0, %c0_0] : memref<8x121xf32, #tpu.memory_space<vmem>>, vector<8x121xf32>
    %c0_1 = arith.constant 0 : index
    %c0_2 = arith.constant 0 : index
    %1 = vector.load %arg1[%c0_1, %c0_2] : memref<121x64xf32, #tpu.memory_space<vmem>>, vector<121x64xf32>
    %c0_3 = arith.constant 0 : index
    %c0_4 = arith.constant 0 : index
    %2 = vector.load %arg2[%c0_3, %c0_4] : memref<8x64xf32, #tpu.memory_space<vmem>>, vector<8x64xf32>
    %c0_5 = arith.constant 0 : index
    %c0_6 = arith.constant 0 : index
    %3 = vector.load %arg3[%c0_5, %c0_6] : memref<64x8xf32, #tpu.memory_space<vmem>>, vector<64x8xf32>
    %cst = arith.constant dense<0.000000e+00> : vector<8x64xf32>
    %4 = tpu.matmul %0, %1, %cst {dimension_numbers = #tpu.dot_dimension_numbers<[1], [0], [0], [1], [0, 0, 1, 1], [], []>, precision = #tpu.contract_precision<fp32>} : vector<8x121xf32>, vector<121x64xf32>, vector<8x64xf32> -> vector<8x64xf32>
    %5 = arith.mulf %4, %2 : vector<8x64xf32>
    %cst_7 = arith.constant dense<0.000000e+00> : vector<8x8xf32>
    %6 = tpu.matmul %5, %3, %cst_7 {dimension_numbers = #tpu.dot_dimension_numbers<[1], [0], [0], [1], [0, 0, 1, 1], [], []>, precision = #tpu.contract_precision<fp32>} : vector<8x64xf32>, vector<64x8xf32>, vector<8x8xf32> -> vector<8x8xf32>
    %c0_8 = arith.constant 0 : index
    %c0_9 = arith.constant 0 : index
    %7 = vector.load %arg4[%c0_8, %c0_9] : memref<8x8xf32, #tpu.memory_space<vmem>>, vector<8x8xf32>
    tpu.vector_store %arg4[%c0_8, %c0_9], %6 {strides = array<i32>} : memref<8x8xf32, #tpu.memory_space<vmem>>, vector<8x8xf32>,
    return
  }
}

</mosaic_0001>

<llo_original>
// kernel: charge.1
$region0: #{charge.1}
  #allocation0 [shape = 'u32[]', space=smem, size = 0x4, offset = 0x4, fixed_abs, tag = 'smem constant byte address 0x4 - core index']
  #allocation1 [shape = 'u32[144,128]{1,0:T(1,128)}', space=vmem, size = 0x12000, scoped, tag = 'internal scratch']
  %s0 = inlined_call_operand.vmem [shape: f32[8,121], index: 0, kind: input, shape index: {}]
  %s1 = inlined_call_operand.vmem [shape: f32[121,64], index: 1, kind: input, shape index: {}]
  %s2 = inlined_call_operand.vmem [shape: f32[8,64], index: 2, kind: input, shape index: {}]
  %s3 = inlined_call_operand.hbm [shape: f32[64,8], index: 3, kind: input, shape index: {}]
  %s4 = inlined_call_operand.hbm [shape: f32[8,8], index: 4, kind: output, shape index: {}]
  %s5 = sld [smem:[#allocation0]]
  $region30: #{charge.1} parent=0
    _
  %s7 = ssub.s32 1, %s5
  %s8 = scalar_select 0, %s7, %s5
  $region1: #{charge.1} parent=0
    #allocation2 [shape = 'u8[32768]{0}', space=vmem, size = 0x8000, scoped, tag = 'input window, operand 3, single buffered']
    #allocation3 [shape = 's32[1]{0}', space=sflag, size = 0x4, scoped, tag = 'scoped memory for charge.1']
    #allocation4 [shape = 's32[1]{0}', space=sflag, size = 0x4, scoped, tag = 'scoped memory for charge.1']
    #allocation5 [shape = 'u8[4096]{0}', space=vmem, size = 0x1000, scoped, tag = 'output window, operand 0, single buffered']
    %9 = vsyncpa [#allocation3], 0
    %10 = vsyncpa [#allocation4], 0
    // Predicated region
    $region2: #{charge.1} parent=1 // pred_check
      _
    $region3: #{charge.1} parent=1 // pred_check_branch
      %12 = sbr.rel (0) target = $region5
    $region4: #{charge.1} parent=1 // pred_region
      _
    $region5: #{charge.1} parent=1 // pred_fallthru
      _
    // Predicated region
    $region6: #{charge.1} parent=1 // pred_check
      _
    $region7: #{charge.1} parent=1 // pred_check_branch
      %14 = sbr.rel (0) target = $region9
    $region8: #{charge.1} parent=1 // pred_region
      _
    $region9: #{charge.1} parent=1 // pred_fallthru
      _
    // Predicated region
    $region10: #{charge.1} parent=1 // pred_check
      _
    $region11: #{charge.1} parent=1 // pred_check_branch
      %16 = sbr.rel (0) target = $region13
    $region12: #{charge.1} parent=1 // pred_region
      _
    $region13: #{charge.1} parent=1 // pred_fallthru
      _
    // Predicated region
    $region14: #{charge.1} parent=1 // pred_check
      _
    $region15: #{charge.1} parent=1 // pred_check_branch
      %18 = sbr.rel (0) target = $region17
    $region16: #{charge.1} parent=1 // pred_region
      %s20 = ssub.s32 1024, 1024
      %21 = vsyncadd [#allocation3], %s20
      %s22 = sshll.u32 [#allocation2], 4
      %s23 = int_to_ptr.vmem [resolvable:$true] %s22
      %28 = dma.hbm_to_vmem [thread:$0]  %s3, 1024, %s23, [#allocation3], 128, 128, 8
    $region17: #{charge.1} parent=1 // pred_fallthru
      _
    // Predicated region
    $region18: #{charge.1} parent=1 // pred_check
      _
    $region19: #{charge.1} parent=1 // pred_check_branch
      %30 = sbr.rel (0) target = $region21
    $region20: #{charge.1} parent=1 // pred_region
      %31 = dma.done [#allocation3], 1024
    $region21: #{charge.1} parent=1 // pred_fallthru
      _
    %v32 = vld [vmem:[%s0] sm:$0xff]
    %v33 = vld [vmem:[%s1] sm:$0xff]
    %v34 = vld [vmem:[%s1 + $0x8] sm:$0xff]
    %v35 = vld [vmem:[%s1 + $0x10] sm:$0xff]
    %v36 = vld [vmem:[%s1 + $0x18] sm:$0xff]
    %v37 = vld [vmem:[%s1 + $0x20] sm:$0xff]
    %v38 = vld [vmem:[%s1 + $0x28] sm:$0xff]
    %v39 = vld [vmem:[%s1 + $0x30] sm:$0xff]
    %v40 = vld [vmem:[%s1 + $0x38] sm:$0xff]
    %v41 = vld [vmem:[%s1 + $0x40] sm:$0xff]
    %v42 = vld [vmem:[%s1 + $0x48] sm:$0xff]
    %v43 = vld [vmem:[%s1 + $0x50] sm:$0xff]
    %v44 = vld [vmem:[%s1 + $0x58] sm:$0xff]
    %v45 = vld [vmem:[%s1 + $0x60] sm:$0xff]
    %v46 = vld [vmem:[%s1 + $0x68] sm:$0xff]
    %v47 = vld [vmem:[%s1 + $0x70] sm:$0xff]
    %v48 = vld [vmem:[%s1 + $0x78] sm:$0x1]
    %v49 = vld [vmem:[%s2] sm:$0xff]
    %v50 = vld [vmem:[#allocation2] sm:$0xff]
    %v51 = vld [vmem:[#allocation2 + $0x8] sm:$0xff]
    %v52 = vld [vmem:[#allocation2 + $0x10] sm:$0xff]
    %v53 = vld [vmem:[#allocation2 + $0x18] sm:$0xff]
    %v54 = vld [vmem:[#allocation2 + $0x20] sm:$0xff]
    %v55 = vld [vmem:[#allocation2 + $0x28] sm:$0xff]
    %v56 = vld [vmem:[#allocation2 + $0x30] sm:$0xff]
    %v57 = vld [vmem:[#allocation2 + $0x38] sm:$0xff]
    %vm58 = vcmask 990208
    %v60 = vsel %vm58, %v32, 0
    %vm62 = vcmask 1040384
    %v64 = vsel %vm62, %v48, 0
    %66 = vmatprep.subr.mxu0 0.0
    %v67 = vand.u32 %v33, 4294901760
    %68 = vmatpush1.msra.mxu0 %v67
    %69 = vmatprep.subr.mxu0 0.0
    %v70 = vand.u32 %v34, 4294901760
    %71 = vmatpush1.msra.mxu0 %v70
    %72 = vmatprep.subr.mxu0 0.0
    %v73 = vand.u32 %v35, 4294901760
    %74 = vmatpush1.msra.mxu0 %v73
    %75 = vmatprep.subr.mxu0 0.0
    %v76 = vand.u32 %v36, 4294901760
    %77 = vmatpush1.msra.mxu0 %v76
    %78 = vmatprep.subr.mxu0 0.0
    %v79 = vand.u32 %v37, 4294901760
    %80 = vmatpush1.msra.mxu0 %v79
    %81 = vmatprep.subr.mxu0 0.0
    %v82 = vand.u32 %v38, 4294901760
    %83 = vmatpush1.msra.mxu0 %v82
    %84 = vmatprep.subr.mxu0 0.0
    %v85 = vand.u32 %v39, 4294901760
    %86 = vmatpush1.msra.mxu0 %v85
    %87 = vmatprep.subr.mxu0 0.0
    %v88 = vand.u32 %v40, 4294901760
    %89 = vmatpush1.msra.mxu0 %v88
    %90 = vmatprep.subr.mxu0 0.0
    %v91 = vand.u32 %v41, 4294901760
    %92 = vmatpush1.msra.mxu0 %v91
    %93 = vmatprep.subr.mxu0 0.0
    %v94 = vand.u32 %v42, 4294901760
    %95 = vmatpush1.msra.mxu0 %v94
    %96 = vmatprep.subr.mxu0 0.0
    %v97 = vand.u32 %v43, 4294901760
    %98 = vmatpush1.msra.mxu0 %v97
    %99 = vmatprep.subr.mxu0 0.0
    %v100 = vand.u32 %v44, 4294901760
    %101 = vmatpush1.msra.mxu0 %v100
    %102 = vmatprep.subr.mxu0 0.0
    %v103 = vand.u32 %v45, 4294901760
    %104 = vmatpush1.msra.mxu0 %v103
    %105 = vmatprep.subr.mxu0 0.0
    %v106 = vand.u32 %v46, 4294901760
    %107 = vmatpush1.msra.mxu0 %v106
    %108 = vmatprep.subr.mxu0 0.0
    %v109 = vand.u32 %v47, 4294901760
    %110 = vmatpush1.msra.mxu0 %v109
    %111 = vmatprep.subr.mxu0 0.0
    %v112 = vand.u32 %v64, 4294901760
    %113 = vmatpush1.msra.mxu0 %v112
    %114 = vmatprep.subr.mxu0 0.0
    %115 = vmatpush1.msra.mxu0 0.0
    %116 = vmatprep.subr.mxu0 0.0
    %117 = vmatpush1.msra.mxu0 0.0
    %118 = vmatprep.subr.mxu0 0.0
    %119 = vmatpush1.msra.mxu0 0.0
    %120 = vmatprep.subr.mxu0 0.0
    %121 = vmatpush1.msra.mxu0 0.0
    %122 = vmatprep.subr.mxu0 0.0
    %123 = vmatpush1.msra.mxu0 0.0
    %124 = vmatprep.subr.mxu0 0.0
    %125 = vmatpush1.msra.mxu0 0.0
    %126 = vmatprep.subr.mxu0 0.0
    %127 = vmatpush1.msra.mxu0 0.0
    %128 = vmatprep.subr.mxu0 0.0
    %129 = vmatpush1.msra.mxu0 0.0
    %130 = vmatprep.subr.mxu0 0.0
    %131 = vmatpush1.msra.mxu0 0.0
    %132 = vmatprep.subr.mxu0 0.0
    %133 = vmatpush1.msra.mxu0 0.0
    %134 = vmatprep.subr.mxu0 0.0
    %135 = vmatpush1.msra.mxu0 0.0
    %136 = vmatprep.subr.mxu0 0.0
    %137 = vmatpush1.msra.mxu0 0.0
    %138 = vmatprep.subr.mxu0 0.0
    %139 = vmatpush1.msra.mxu0 0.0
    %140 = vmatprep.subr.mxu0 0.0
    %141 = vmatpush1.msra.mxu0 0.0
    %142 = vmatprep.subr.mxu0 0.0
    %143 = vmatpush1.msra.mxu0 0.0
    %144 = vmatprep.subr.mxu0 0.0
    %145 = vmatpush1.msra.mxu0 0.0
    %146 = vmatprep.mubr.f32.mxu0 0.0
    %v147 = vand.u32 %v60, 4294901760
    %v148 = vsub.f32 %v60, %v147
    %v149 = vand.u32 %v148, 4294901760
    %v150 = vsub.f32 %v148, %v149
    %v151 = vand.u32 %v150, 4294901760
    %152 = vmatmul.mubr.f32.gmra.mrb[0].mxu0 %v151
    %v153 = vpop.f32.mrb[0].mxu0
    %v154 = vadd.f32 0.0, %v153
    %v155 = vpop.f32.mrb[0].mxu0
    %156 = vdwg.mxu0
    %157 = vmatprep.subr.mxu0 0.0
    %v158 = vand.u32 %v33, 4294901760
    %v159 = vsub.f32 %v33, %v158
    %v160 = vand.u32 %v159, 4294901760
    %v161 = vsub.f32 %v159, %v160
    %v162 = vand.u32 %v161, 4294901760
    %163 = vmatpush1.msra.mxu0 %v162
    %164 = vmatprep.subr.mxu0 0.0
    %v165 = vand.u32 %v34, 4294901760
    %v166 = vsub.f32 %v34, %v165
    %v167 = vand.u32 %v166, 4294901760
    %v168 = vsub.f32 %v166, %v167
    %v169 = vand.u32 %v168, 4294901760
    %170 = vmatpush1.msra.mxu0 %v169
    %171 = vmatprep.subr.mxu0 0.0
    %v172 = vand.u32 %v35, 4294901760
    %v173 = vsub.f32 %v35, %v172
    %v174 = vand.u32 %v173, 4294901760
    %v175 = vsub.f32 %v173, %v174
    %v176 = vand.u32 %v175, 4294901760
    %177 = vmatpush1.msra.mxu0 %v176
    %178 = vmatprep.subr.mxu0 0.0
    %v179 = vand.u32 %v36, 4294901760
    %v180 = vsub.f32 %v36, %v179
    %v181 = vand.u32 %v180, 4294901760
    %v182 = vsub.f32 %v180, %v181
    %v183 = vand.u32 %v182, 4294901760
    %184 = vmatpush1.msra.mxu0 %v183
    %185 = vmatprep.subr.mxu0 0.0
    %v186 = vand.u32 %v37, 4294901760
    %v187 = vsub.f32 %v37, %v186
    %v188 = vand.u32 %v187, 4294901760
    %v189 = vsub.f32 %v187, %v188
    %v190 = vand.u32 %v189, 4294901760
    %191 = vmatpush1.msra.mxu0 %v190
    %192 = vmatprep.subr.mxu0 0.0
    %v193 = vand.u32 %v38, 4294901760
    %v194 = vsub.f32 %v38, %v193
    %v195 = vand.u32 %v194, 4294901760
    %v196 = vsub.f32 %v194, %v195
    %v197 = vand.u32 %v196, 4294901760
    %198 = vmatpush1.msra.mxu0 %v197
    %199 = vmatprep.subr.mxu0 0.0
    %v200 = vand.u32 %v39, 4294901760
    %v201 = vsub.f32 %v39, %v200
    %v202 = vand.u32 %v201, 4294901760
    %v203 = vsub.f32 %v201, %v202
    %v204 = vand.u32 %v203, 4294901760
    %205 = vmatpush1.msra.mxu0 %v204
    %206 = vmatprep.subr.mxu0 0.0
    %v207 = vand.u32 %v40, 4294901760
    %v208 = vsub.f32 %v40, %v207
    %v209 = vand.u32 %v208, 4294901760
    %v210 = vsub.f32 %v208, %v209
    %v211 = vand.u32 %v210, 4294901760
    %212 = vmatpush1.msra.mxu0 %v211
    %213 = vmatprep.subr.mxu0 0.0
    %v214 = vand.u32 %v41, 4294901760
    %v215 = vsub.f32 %v41, %v214
    %v216 = vand.u32 %v215, 4294901760
    %v217 = vsub.f32 %v215, %v216
    %v218 = vand.u32 %v217, 4294901760
    %219 = vmatpush1.msra.mxu0 %v218
    %220 = vmatprep.subr.mxu0 0.0
    %v221 = vand.u32 %v42, 4294901760
    %v222 = vsub.f32 %v42, %v221
    %v223 = vand.u32 %v222, 4294901760
    %v224 = vsub.f32 %v222, %v223
    %v225 = vand.u32 %v224, 4294901760
    %226 = vmatpush1.msra.mxu0 %v225
    %227 = vmatprep.subr.mxu0 0.0
    %v228 = vand.u32 %v43, 4294901760
    %v229 = vsub.f32 %v43, %v228
    %v230 = vand.u32 %v229, 4294901760
    %v231 = vsub.f32 %v229, %v230
    %v232 = vand.u32 %v231, 4294901760
    %233 = vmatpush1.msra.mxu0 %v232
    %234 = vmatprep.subr.mxu0 0.0
    %v235 = vand.u32 %v44, 4294901760
    %v236 = vsub.f32 %v44, %v235
    %v237 = vand.u32 %v236, 4294901760
    %v238 = vsub.f32 %v236, %v237
    %v239 = vand.u32 %v238, 4294901760
    %240 = vmatpush1.msra.mxu0 %v239
    %241 = vmatprep.subr.mxu0 0.0
    %v242 = vand.u32 %v45, 4294901760
    %v243 = vsub.f32 %v45, %v242
    %v244 = vand.u32 %v243, 4294901760
    %v245 = vsub.f32 %v243, %v244
    %v246 = vand.u32 %v245, 4294901760
    %247 = vmatpush1.msra.mxu0 %v246
    %248 = vmatprep.subr.mxu0 0.0
    %v249 = vand.u32 %v46, 4294901760
    %v250 = vsub.f32 %v46, %v249
    %v251 = vand.u32 %v250, 4294901760
    %v252 = vsub.f32 %v250, %v251
    %v253 = vand.u32 %v252, 4294901760
    %254 = vmatpush1.msra.mxu0 %v253
    %255 = vmatprep.subr.mxu0 0.0
    %v256 = vand.u32 %v47, 4294901760
    %v257 = vsub.f32 %v47, %v256
    %v258 = vand.u32 %v257, 4294901760
    %v259 = vsub.f32 %v257, %v258
    %v260 = vand.u32 %v259, 4294901760
    %261 = vmatpush1.msra.mxu0 %v260
    %262 = vmatprep.subr.mxu0 0.0
    %v263 = vand.u32 %v64, 4294901760
    %v264 = vsub.f32 %v64, %v263
    %v265 = vand.u32 %v264, 4294901760
    %v266 = vsub.f32 %v264, %v265
    %v267 = vand.u32 %v266, 4294901760
    %268 = vmatpush1.msra.mxu0 %v267
    %269 = vmatprep.subr.mxu0 0.0
    %270 = vmatpush1.msra.mxu0 0.0
    %271 = vmatprep.subr.mxu0 0.0
    %272 = vmatpush1.msra.mxu0 0.0
    %273 = vmatprep.subr.mxu0 0.0
    %274 = vmatpush1.msra.mxu0 0.0
    %275 = vmatprep.subr.mxu0 0.0
    %276 = vmatpush1.msra.mxu0 0.0
    %277 = vmatprep.subr.mxu0 0.0
    %278 = vmatpush1.msra.mxu0 0.0
    %279 = vmatprep.subr.mxu0 0.0
    %280 = vmatpush1.msra.mxu0 0.0
    %281 = vmatprep.subr.mxu0 0.0
    %282 = vmatpush1.msra.mxu0 0.0
    %283 = vmatprep.subr.mxu0 0.0
    %284 = vmatpush1.msra.mxu0 0.0
    %285 = vmatprep.subr.mxu0 0.0
    %286 = vmatpush1.msra.mxu0 0.0
    %287 = vmatprep.subr.mxu0 0.0
    %288 = vmatpush1.msra.mxu0 0.0
    %289 = vmatprep.subr.mxu0 0.0
    %290 = vmatpush1.msra.mxu0 0.0
    %291 = vmatprep.subr.mxu0 0.0
    %292 = vmatpush1.msra.mxu0 0.0
    %293 = vmatprep.subr.mxu0 0.0
    %294 = vmatpush1.msra.mxu0 0.0
    %295 = vmatprep.subr.mxu0 0.0
    %296 = vmatpush1.msra.mxu0 0.0
    %297 = vmatprep.subr.mxu0 0.0
    %298 = vmatpush1.msra.mxu0 0.0
    %299 = vmatprep.subr.mxu0 0.0
    %300 = vmatpush1.msra.mxu0 0.0
    %301 = vmatprep.mubr.f32.mxu0 0.0
    %v302 = vand.u32 %v60, 4294901760
    %303 = vmatmul.mubr.f32.gmra.mrb[0].mxu0 %v302
    %v304 = vpop.f32.mrb[0].mxu0
    %v305 = vadd.f32 %v154, %v304
    %v306 = vpop.f32.mrb[0].mxu0
    %307 = vdwg.mxu0
    %308 = vmatprep.subr.mxu0 0.0
    %v309 = vand.u32 %v33, 4294901760
    %v310 = vsub.f32 %v33, %v309
    %311 = vmatpush1.msra.mxu0 %v310
    %312 = vmatprep.subr.mxu0 0.0
    %v313 = vand.u32 %v34, 4294901760
    %v314 = vsub.f32 %v34, %v313
    %315 = vmatpush1.msra.mxu0 %v314
    %316 = vmatprep.subr.mxu0 0.0
    %v317 = vand.u32 %v35, 4294901760
    %v318 = vsub.f32 %v35, %v317
    %319 = vmatpush1.msra.mxu0 %v318
    %320 = vmatprep.subr.mxu0 0.0
    %v321 = vand.u32 %v36, 4294901760
    %v322 = vsub.f32 %v36, %v321
    %323 = vmatpush1.msra.mxu0 %v322
    %324 = vmatprep.subr.mxu0 0.0
    %v325 = vand.u32 %v37, 4294901760
    %v326 = vsub.f32 %v37, %v325
    %327 = vmatpush1.msra.mxu0 %v326
    %328 = vmatprep.subr.mxu0 0.0
    %v329 = vand.u32 %v38, 4294901760
    %v330 = vsub.f32 %v38, %v329
    %331 = vmatpush1.msra.mxu0 %v330
    %332 = vmatprep.subr.mxu0 0.0
    %v333 = vand.u32 %v39, 4294901760
    %v334 = vsub.f32 %v39, %v333
    %335 = vmatpush1.msra.mxu0 %v334
    %336 = vmatprep.subr.mxu0 0.0
    %v337 = vand.u32 %v40, 4294901760
    %v338 = vsub.f32 %v40, %v337
    %339 = vmatpush1.msra.mxu0 %v338
    %340 = vmatprep.subr.mxu0 0.0
    %v341 = vand.u32 %v41, 4294901760
    %v342 = vsub.f32 %v41, %v341
    %343 = vmatpush1.msra.mxu0 %v342
    %344 = vmatprep.subr.mxu0 0.0
    %v345 = vand.u32 %v42, 4294901760
    %v346 = vsub.f32 %v42, %v345
    %347 = vmatpush1.msra.mxu0 %v346
    %348 = vmatprep.subr.mxu0 0.0
    %v349 = vand.u32 %v43, 4294901760
    %v350 = vsub.f32 %v43, %v349
    %351 = vmatpush1.msra.mxu0 %v350
    %352 = vmatprep.subr.mxu0 0.0
    %v353 = vand.u32 %v44, 4294901760
    %v354 = vsub.f32 %v44, %v353
    %355 = vmatpush1.msra.mxu0 %v354
    %356 = vmatprep.subr.mxu0 0.0
    %v357 = vand.u32 %v45, 4294901760
    %v358 = vsub.f32 %v45, %v357
    %359 = vmatpush1.msra.mxu0 %v358
    %360 = vmatprep.subr.mxu0 0.0
    %v361 = vand.u32 %v46, 4294901760
    %v362 = vsub.f32 %v46, %v361
    %363 = vmatpush1.msra.mxu0 %v362
    %364 = vmatprep.subr.mxu0 0.0
    %v365 = vand.u32 %v47, 4294901760
    %v366 = vsub.f32 %v47, %v365
    %367 = vmatpush1.msra.mxu0 %v366
    %368 = vmatprep.subr.mxu0 0.0
    %v369 = vand.u32 %v64, 4294901760
    %v370 = vsub.f32 %v64, %v369
    %371 = vmatpush1.msra.mxu0 %v370
    %372 = vmatprep.subr.mxu0 0.0
    %373 = vmatpush1.msra.mxu0 0.0
    %374 = vmatprep.subr.mxu0 0.0
    %375 = vmatpush1.msra.mxu0 0.0
    %376 = vmatprep.subr.mxu0 0.0
    %377 = vmatpush1.msra.mxu0 0.0
    %378 = vmatprep.subr.mxu0 0.0
    %379 = vmatpush1.msra.mxu0 0.0
    %380 = vmatprep.subr.mxu0 0.0
    %381 = vmatpush1.msra.mxu0 0.0
    %382 = vmatprep.subr.mxu0 0.0
    %383 = vmatpush1.msra.mxu0 0.0
    %384 = vmatprep.subr.mxu0 0.0
    %385 = vmatpush1.msra.mxu0 0.0
    %386 = vmatprep.subr.mxu0 0.0
    %387 = vmatpush1.msra.mxu0 0.0
    %388 = vmatprep.subr.mxu0 0.0
    %389 = vmatpush1.msra.mxu0 0.0
    %390 = vmatprep.subr.mxu0 0.0
    %391 = vmatpush1.msra.mxu0 0.0
    %392 = vmatprep.subr.mxu0 0.0
    %393 = vmatpush1.msra.mxu0 0.0
    %394 = vmatprep.subr.mxu0 0.0
    %395 = vmatpush1.msra.mxu0 0.0
    %396 = vmatprep.subr.mxu0 0.0
    %397 = vmatpush1.msra.mxu0 0.0
    %398 = vmatprep.subr.mxu0 0.0
    %399 = vmatpush1.msra.mxu0 0.0
    %400 = vmatprep.subr.mxu0 0.0
    %401 = vmatpush1.msra.mxu0 0.0
    %402 = vmatprep.subr.mxu0 0.0
    %403 = vmatpush1.msra.mxu0 0.0
    %404 = vmatprep.mubr.f32.mxu0 0.0
    %v405 = vand.u32 %v60, 4294901760
    %v406 = vsub.f32 %v60, %v405
    %407 = vmatmul.mubr.f32.gmra.mrb[0].mxu0 %v406
    %v408 = vpop.f32.mrb[0].mxu0
    %v409 = vadd.f32 %v305, %v408
    %v410 = vpop.f32.mrb[0].mxu0
    %411 = vdwg.mxu0
    %412 = vmatprep.subr.mxu0 0.0
    %v413 = vand.u32 %v33, 4294901760
    %414 = vmatpush1.msra.mxu0 %v413
    %415 = vmatprep.subr.mxu0 0.0
    %v416 = vand.u32 %v34, 4294901760
    %417 = vmatpush1.msra.mxu0 %v416
    %418 = vmatprep.subr.mxu0 0.0
    %v419 = vand.u32 %v35, 4294901760
    %420 = vmatpush1.msra.mxu0 %v419
    %421 = vmatprep.subr.mxu0 0.0
    %v422 = vand.u32 %v36, 4294901760
    %423 = vmatpush1.msra.mxu0 %v422
    %424 = vmatprep.subr.mxu0 0.0
    %v425 = vand.u32 %v37, 4294901760
    %426 = vmatpush1.msra.mxu0 %v425
    %427 = vmatprep.subr.mxu0 0.0
    %v428 = vand.u32 %v38, 4294901760
    %429 = vmatpush1.msra.mxu0 %v428
    %430 = vmatprep.subr.mxu0 0.0
    %v431 = vand.u32 %v39, 4294901760
    %432 = vmatpush1.msra.mxu0 %v431
    %433 = vmatprep.subr.mxu0 0.0
    %v434 = vand.u32 %v40, 4294901760
    %435 = vmatpush1.msra.mxu0 %v434
    %436 = vmatprep.subr.mxu0 0.0
    %v437 = vand.u32 %v41, 4294901760
    %438 = vmatpush1.msra.mxu0 %v437
    %439 = vmatprep.subr.mxu0 0.0
    %v440 = vand.u32 %v42, 4294901760
    %441 = vmatpush1.msra.mxu0 %v440
    %442 = vmatprep.subr.mxu0 0.0
    %v443 = vand.u32 %v43, 4294901760
    %444 = vmatpush1.msra.mxu0 %v443
    %445 = vmatprep.subr.mxu0 0.0
    %v446 = vand.u32 %v44, 4294901760
    %447 = vmatpush1.msra.mxu0 %v446
    %448 = vmatprep.subr.mxu0 0.0
    %v449 = vand.u32 %v45, 4294901760
    %450 = vmatpush1.msra.mxu0 %v449
    %451 = vmatprep.subr.mxu0 0.0
    %v452 = vand.u32 %v46, 4294901760
    %453 = vmatpush1.msra.mxu0 %v452
    %454 = vmatprep.subr.mxu0 0.0
    %v455 = vand.u32 %v47, 4294901760
    %456 = vmatpush1.msra.mxu0 %v455
    %457 = vmatprep.subr.mxu0 0.0
    %v458 = vand.u32 %v64, 4294901760
    %459 = vmatpush1.msra.mxu0 %v458
    %460 = vmatprep.subr.mxu0 0.0
    %461 = vmatpush1.msra.mxu0 0.0
    %462 = vmatprep.subr.mxu0 0.0
    %463 = vmatpush1.msra.mxu0 0.0
    %464 = vmatprep.subr.mxu0 0.0
    %465 = vmatpush1.msra.mxu0 0.0
    %466 = vmatprep.subr.mxu0 0.0
    %467 = vmatpush1.msra.mxu0 0.0
    %468 = vmatprep.subr.mxu0 0.0
    %469 = vmatpush1.msra.mxu0 0.0
    %470 = vmatprep.subr.mxu0 0.0
    %471 = vmatpush1.msra.mxu0 0.0
    %472 = vmatprep.subr.mxu0 0.0
    %473 = vmatpush1.msra.mxu0 0.0
    %474 = vmatprep.subr.mxu0 0.0
    %475 = vmatpush1.msra.mxu0 0.0
    %476 = vmatprep.subr.mxu0 0.0
    %477 = vmatpush1.msra.mxu0 0.0
    %478 = vmatprep.subr.mxu0 0.0
    %479 = vmatpush1.msra.mxu0 0.0
    %480 = vmatprep.subr.mxu0 0.0
    %481 = vmatpush1.msra.mxu0 0.0
    %482 = vmatprep.subr.mxu0 0.0
    %483 = vmatpush1.msra.mxu0 0.0
    %484 = vmatprep.subr.mxu0 0.0
    %485 = vmatpush1.msra.mxu0 0.0
    %486 = vmatprep.subr.mxu0 0.0
    %487 = vmatpush1.msra.mxu0 0.0
    %488 = vmatprep.subr.mxu0 0.0
    %489 = vmatpush1.msra.mxu0 0.0
    %490 = vmatprep.subr.mxu0 0.0
    %491 = vmatpush1.msra.mxu0 0.0
    %492 = vmatprep.mubr.f32.mxu0 0.0
    %v493 = vand.u32 %v60, 4294901760
    %v494 = vsub.f32 %v60, %v493
    %v495 = vand.u32 %v494, 4294901760
    %496 = vmatmul.mubr.f32.gmra.mrb[0].mxu0 %v495
    %v497 = vpop.f32.mrb[0].mxu0
    %v498 = vadd.f32 %v409, %v497
    %v499 = vpop.f32.mrb[0].mxu0
    %500 = vdwg.mxu0
    %501 = vmatprep.subr.mxu0 0.0
    %v502 = vand.u32 %v33, 4294901760
    %v503 = vsub.f32 %v33, %v502
    %v504 = vand.u32 %v503, 4294901760
    %505 = vmatpush1.msra.mxu0 %v504
    %506 = vmatprep.subr.mxu0 0.0
    %v507 = vand.u32 %v34, 4294901760
    %v508 = vsub.f32 %v34, %v507
    %v509 = vand.u32 %v508, 4294901760
    %510 = vmatpush1.msra.mxu0 %v509
    %511 = vmatprep.subr.mxu0 0.0
    %v512 = vand.u32 %v35, 4294901760
    %v513 = vsub.f32 %v35, %v512
    %v514 = vand.u32 %v513, 4294901760
    %515 = vmatpush1.msra.mxu0 %v514
    %516 = vmatprep.subr.mxu0 0.0
    %v517 = vand.u32 %v36, 4294901760
    %v518 = vsub.f32 %v36, %v517
    %v519 = vand.u32 %v518, 4294901760
    %520 = vmatpush1.msra.mxu0 %v519
    %521 = vmatprep.subr.mxu0 0.0
    %v522 = vand.u32 %v37, 4294901760
    %v523 = vsub.f32 %v37, %v522
    %v524 = vand.u32 %v523, 4294901760
    %525 = vmatpush1.msra.mxu0 %v524
    %526 = vmatprep.subr.mxu0 0.0
    %v527 = vand.u32 %v38, 4294901760
    %v528 = vsub.f32 %v38, %v527
    %v529 = vand.u32 %v528, 4294901760
    %530 = vmatpush1.msra.mxu0 %v529
    %531 = vmatprep.subr.mxu0 0.0
    %v532 = vand.u32 %v39, 4294901760
    %v533 = vsub.f32 %v39, %v532
    %v534 = vand.u32 %v533, 4294901760
    %535 = vmatpush1.msra.mxu0 %v534
    %536 = vmatprep.subr.mxu0 0.0
    %v537 = vand.u32 %v40, 4294901760
    %v538 = vsub.f32 %v40, %v537
    %v539 = vand.u32 %v538, 4294901760
    %540 = vmatpush1.msra.mxu0 %v539
    %541 = vmatprep.subr.mxu0 0.0
    %v542 = vand.u32 %v41, 4294901760
    %v543 = vsub.f32 %v41, %v542
    %v544 = vand.u32 %v543, 4294901760
    %545 = vmatpush1.msra.mxu0 %v544
    %546 = vmatprep.subr.mxu0 0.0
    %v547 = vand.u32 %v42, 4294901760
    %v548 = vsub.f32 %v42, %v547
    %v549 = vand.u32 %v548, 4294901760
    %550 = vmatpush1.msra.mxu0 %v549
    %551 = vmatprep.subr.mxu0 0.0
    %v552 = vand.u32 %v43, 4294901760
    %v553 = vsub.f32 %v43, %v552
    %v554 = vand.u32 %v553, 4294901760
    %555 = vmatpush1.msra.mxu0 %v554
    %556 = vmatprep.subr.mxu0 0.0
    %v557 = vand.u32 %v44, 4294901760
    %v558 = vsub.f32 %v44, %v557
    %v559 = vand.u32 %v558, 4294901760
    %560 = vmatpush1.msra.mxu0 %v559
    %561 = vmatprep.subr.mxu0 0.0
    %v562 = vand.u32 %v45, 4294901760
    %v563 = vsub.f32 %v45, %v562
    %v564 = vand.u32 %v563, 4294901760
    %565 = vmatpush1.msra.mxu0 %v564
    %566 = vmatprep.subr.mxu0 0.0
    %v567 = vand.u32 %v46, 4294901760
    %v568 = vsub.f32 %v46, %v567
    %v569 = vand.u32 %v568, 4294901760
    %570 = vmatpush1.msra.mxu0 %v569
    %571 = vmatprep.subr.mxu0 0.0
    %v572 = vand.u32 %v47, 4294901760
    %v573 = vsub.f32 %v47, %v572
    %v574 = vand.u32 %v573, 4294901760
    %575 = vmatpush1.msra.mxu0 %v574
    %576 = vmatprep.subr.mxu0 0.0
    %v577 = vand.u32 %v64, 4294901760
    %v578 = vsub.f32 %v64, %v577
    %v579 = vand.u32 %v578, 4294901760
    %580 = vmatpush1.msra.mxu0 %v579
    %581 = vmatprep.subr.mxu0 0.0
    %582 = vmatpush1.msra.mxu0 0.0
    %583 = vmatprep.subr.mxu0 0.0
    %584 = vmatpush1.msra.mxu0 0.0
    %585 = vmatprep.subr.mxu0 0.0
    %586 = vmatpush1.msra.mxu0 0.0
    %587 = vmatprep.subr.mxu0 0.0
    %588 = vmatpush1.msra.mxu0 0.0
    %589 = vmatprep.subr.mxu0 0.0
    %590 = vmatpush1.msra.mxu0 0.0
    %591 = vmatprep.subr.mxu0 0.0
    %592 = vmatpush1.msra.mxu0 0.0
    %593 = vmatprep.subr.mxu0 0.0
    %594 = vmatpush1.msra.mxu0 0.0
    %595 = vmatprep.subr.mxu0 0.0
    %596 = vmatpush1.msra.mxu0 0.0
    %597 = vmatprep.subr.mxu0 0.0
    %598 = vmatpush1.msra.mxu0 0.0
    %599 = vmatprep.subr.mxu0 0.0
    %600 = vmatpush1.msra.mxu0 0.0
    %601 = vmatprep.subr.mxu0 0.0
    %602 = vmatpush1.msra.mxu0 0.0
    %603 = vmatprep.subr.mxu0 0.0
    %604 = vmatpush1.msra.mxu0 0.0
    %605 = vmatprep.subr.mxu0 0.0
    %606 = vmatpush1.msra.mxu0 0.0
    %607 = vmatprep.subr.mxu0 0.0
    %608 = vmatpush1.msra.mxu0 0.0
    %609 = vmatprep.subr.mxu0 0.0
    %610 = vmatpush1.msra.mxu0 0.0
    %611 = vmatprep.subr.mxu0 0.0
    %612 = vmatpush1.msra.mxu0 0.0
    %613 = vmatprep.mubr.f32.mxu0 0.0
    %v614 = vand.u32 %v60, 4294901760
    %615 = vmatmul.mubr.f32.gmra.mrb[0].mxu0 %v614
    %v616 = vpop.f32.mrb[0].mxu0
    %v617 = vadd.f32 %v498, %v616
    %v618 = vpop.f32.mrb[0].mxu0
    %619 = vdwg.mxu0
    %620 = vmatprep.subr.mxu0 0.0
    %v621 = vand.u32 %v33, 4294901760
    %622 = vmatpush1.msra.mxu0 %v621
    %623 = vmatprep.subr.mxu0 0.0
    %v624 = vand.u32 %v34, 4294901760
    %625 = vmatpush1.msra.mxu0 %v624
    %626 = vmatprep.subr.mxu0 0.0
    %v627 = vand.u32 %v35, 4294901760
    %628 = vmatpush1.msra.mxu0 %v627
    %629 = vmatprep.subr.mxu0 0.0
    %v630 = vand.u32 %v36, 4294901760
    %631 = vmatpush1.msra.mxu0 %v630
    %632 = vmatprep.subr.mxu0 0.0
    %v633 = vand.u32 %v37, 4294901760
    %634 = vmatpush1.msra.mxu0 %v633
    %635 = vmatprep.subr.mxu0 0.0
    %v636 = vand.u32 %v38, 4294901760
    %637 = vmatpush1.msra.mxu0 %v636
    %638 = vmatprep.subr.mxu0 0.0
    %v639 = vand.u32 %v39, 4294901760
    %640 = vmatpush1.msra.mxu0 %v639
    %641 = vmatprep.subr.mxu0 0.0
    %v642 = vand.u32 %v40, 4294901760
    %643 = vmatpush1.msra.mxu0 %v642
    %644 = vmatprep.subr.mxu0 0.0
    %v645 = vand.u32 %v41, 4294901760
    %646 = vmatpush1.msra.mxu0 %v645
    %647 = vmatprep.subr.mxu0 0.0
    %v648 = vand.u32 %v42, 4294901760
    %649 = vmatpush1.msra.mxu0 %v648
    %650 = vmatprep.subr.mxu0 0.0
    %v651 = vand.u32 %v43, 4294901760
    %652 = vmatpush1.msra.mxu0 %v651
    %653 = vmatprep.subr.mxu0 0.0
    %v654 = vand.u32 %v44, 4294901760
    %655 = vmatpush1.msra.mxu0 %v654
    %656 = vmatprep.subr.mxu0 0.0
    %v657 = vand.u32 %v45, 4294901760
    %658 = vmatpush1.msra.mxu0 %v657
    %659 = vmatprep.subr.mxu0 0.0
    %v660 = vand.u32 %v46, 4294901760
    %661 = vmatpush1.msra.mxu0 %v660
    %662 = vmatprep.subr.mxu0 0.0
    %v663 = vand.u32 %v47, 4294901760
    %664 = vmatpush1.msra.mxu0 %v663
    %665 = vmatprep.subr.mxu0 0.0
    %v666 = vand.u32 %v64, 4294901760
    %667 = vmatpush1.msra.mxu0 %v666
    %668 = vmatprep.subr.mxu0 0.0
    %669 = vmatpush1.msra.mxu0 0.0
    %670 = vmatprep.subr.mxu0 0.0
    %671 = vmatpush1.msra.mxu0 0.0
    %672 = vmatprep.subr.mxu0 0.0
    %673 = vmatpush1.msra.mxu0 0.0
    %674 = vmatprep.subr.mxu0 0.0
    %675 = vmatpush1.msra.mxu0 0.0
    %676 = vmatprep.subr.mxu0 0.0
    %677 = vmatpush1.msra.mxu0 0.0
    %678 = vmatprep.subr.mxu0 0.0
    %679 = vmatpush1.msra.mxu0 0.0
    %680 = vmatprep.subr.mxu0 0.0
    %681 = vmatpush1.msra.mxu0 0.0
    %682 = vmatprep.subr.mxu0 0.0
    %683 = vmatpush1.msra.mxu0 0.0
    %684 = vmatprep.subr.mxu0 0.0
    %685 = vmatpush1.msra.mxu0 0.0
    %686 = vmatprep.subr.mxu0 0.0
    %687 = vmatpush1.msra.mxu0 0.0
    %688 = vmatprep.subr.mxu0 0.0
    %689 = vmatpush1.msra.mxu0 0.0
    %690 = vmatprep.subr.mxu0 0.0
    %691 = vmatpush1.msra.mxu0 0.0
    %692 = vmatprep.subr.mxu0 0.0
    %693 = vmatpush1.msra.mxu0 0.0
    %694 = vmatprep.subr.mxu0 0.0
    %695 = vmatpush1.msra.mxu0 0.0
    %696 = vmatprep.subr.mxu0 0.0
    %697 = vmatpush1.msra.mxu0 0.0
    %698 = vmatprep.subr.mxu0 0.0
    %699 = vmatpush1.msra.mxu0 0.0
    %700 = vmatprep.mubr.f32.mxu0 0.0
    %v701 = vand.u32 %v60, 4294901760
    %702 = vmatmul.mubr.f32.gmra.mrb[0].mxu0 %v701
    %v703 = vpop.f32.mrb[0].mxu0
    %v704 = vadd.f32 %v617, %v703
    %v705 = vpop.f32.mrb[0].mxu0
    %706 = vdwg.mxu0
    %v707 = vmul.f32 %v704, %v49
    %vm708 = vcmask 523264
    %v710 = vsel %vm708, %v707, 0
    %712 = vmatprep.subr.mxu0 0.0
    %v713 = vand.u32 %v50, 4294901760
    %714 = vmatpush1.msra.mxu0 %v713
    %715 = vmatprep.subr.mxu0 0.0
    %v716 = vand.u32 %v51, 4294901760
    %717 = vmatpush1.msra.mxu0 %v716
    %718 = vmatprep.subr.mxu0 0.0
    %v719 = vand.u32 %v52, 4294901760
    %720 = vmatpush1.msra.mxu0 %v719
    %721 = vmatprep.subr.mxu0 0.0
    %v722 = vand.u32 %v53, 4294901760
    %723 = vmatpush1.msra.mxu0 %v722
    %724 = vmatprep.subr.mxu0 0.0
    %v725 = vand.u32 %v54, 4294901760
    %726 = vmatpush1.msra.mxu0 %v725
    %727 = vmatprep.subr.mxu0 0.0
    %v728 = vand.u32 %v55, 4294901760
    %729 = vmatpush1.msra.mxu0 %v728
    %730 = vmatprep.subr.mxu0 0.0
    %v731 = vand.u32 %v56, 4294901760
    %732 = vmatpush1.msra.mxu0 %v731
    %733 = vmatprep.subr.mxu0 0.0
    %v734 = vand.u32 %v57, 4294901760
    %735 = vmatpush1.msra.mxu0 %v734
    %736 = vmatprep.subr.mxu0 0.0
    %737 = vmatpush1.msra.mxu0 0.0
    %738 = vmatprep.subr.mxu0 0.0
    %739 = vmatpush1.msra.mxu0 0.0
    %740 = vmatprep.subr.mxu0 0.0
    %741 = vmatpush1.msra.mxu0 0.0
    %742 = vmatprep.subr.mxu0 0.0
    %743 = vmatpush1.msra.mxu0 0.0
    %744 = vmatprep.subr.mxu0 0.0
    %745 = vmatpush1.msra.mxu0 0.0
    %746 = vmatprep.subr.mxu0 0.0
    %747 = vmatpush1.msra.mxu0 0.0
    %748 = vmatprep.subr.mxu0 0.0
    %749 = vmatpush1.msra.mxu0 0.0
    %750 = vmatprep.subr.mxu0 0.0
    %751 = vmatpush1.msra.mxu0 0.0
    %752 = vmatprep.subr.mxu0 0.0
    %753 = vmatpush1.msra.mxu0 0.0
    %754 = vmatprep.subr.mxu0 0.0
    %755 = vmatpush1.msra.mxu0 0.0
    %756 = vmatprep.subr.mxu0 0.0
    %757 = vmatpush1.msra.mxu0 0.0
    %758 = vmatprep.subr.mxu0 0.0
    %759 = vmatpush1.msra.mxu0 0.0
    %760 = vmatprep.subr.mxu0 0.0
    %761 = vmatpush1.msra.mxu0 0.0
    %762 = vmatprep.subr.mxu0 0.0
    %763 = vmatpush1.msra.mxu0 0.0
    %764 = vmatprep.subr.mxu0 0.0
    %765 = vmatpush1.msra.mxu0 0.0
    %766 = vmatprep.subr.mxu0 0.0
    %767 = vmatpush1.msra.mxu0 0.0
    %768 = vmatprep.subr.mxu0 0.0
    %769 = vmatpush1.msra.mxu0 0.0
    %770 = vmatprep.subr.mxu0 0.0
    %771 = vmatpush1.msra.mxu0 0.0
    %772 = vmatprep.subr.mxu0 0.0
    %773 = vmatpush1.msra.mxu0 0.0
    %774 = vmatprep.subr.mxu0 0.0
    %775 = vmatpush1.msra.mxu0 0.0
    %776 = vmatprep.subr.mxu0 0.0
    %777 = vmatpush1.msra.mxu0 0.0
    %778 = vmatprep.subr.mxu0 0.0
    %779 = vmatpush1.msra.mxu0 0.0
    %780 = vmatprep.subr.mxu0 0.0
    %781 = vmatpush1.msra.mxu0 0.0
    %782 = vmatprep.subr.mxu0 0.0
    %783 = vmatpush1.msra.mxu0 0.0
    %784 = vmatprep.mubr.f32.mxu0 0.0
    %v785 = vand.u32 %v710, 4294901760
    %v786 = vsub.f32 %v710, %v785
    %v787 = vand.u32 %v786, 4294901760
    %v788 = vsub.f32 %v786, %v787
    %v789 = vand.u32 %v788, 4294901760
    %790 = vmatmul.mubr.f32.gmra.mrb[0].mxu0 %v789
    %v791 = vpop.f32.mrb[0].mxu0
    %v792 = vadd.f32 0.0, %v791
    %v793 = vpop.f32.mrb[0].mxu0
    %794 = vdwg.mxu0
    %795 = vmatprep.subr.mxu0 0.0
    %v796 = vand.u32 %v50, 4294901760
    %v797 = vsub.f32 %v50, %v796
    %v798 = vand.u32 %v797, 4294901760
    %v799 = vsub.f32 %v797, %v798
    %v800 = vand.u32 %v799, 4294901760
    %801 = vmatpush1.msra.mxu0 %v800
    %802 = vmatprep.subr.mxu0 0.0
    %v803 = vand.u32 %v51, 4294901760
    %v804 = vsub.f32 %v51, %v803
    %v805 = vand.u32 %v804, 4294901760
    %v806 = vsub.f32 %v804, %v805
    %v807 = vand.u32 %v806, 4294901760
    %808 = vmatpush1.msra.mxu0 %v807
    %809 = vmatprep.subr.mxu0 0.0
    %v810 = vand.u32 %v52, 4294901760
    %v811 = vsub.f32 %v52, %v810
    %v812 = vand.u32 %v811, 4294901760
    %v813 = vsub.f32 %v811, %v812
    %v814 = vand.u32 %v813, 4294901760
    %815 = vmatpush1.msra.mxu0 %v814
    %816 = vmatprep.subr.mxu0 0.0
    %v817 = vand.u32 %v53, 4294901760
    %v818 = vsub.f32 %v53, %v817
    %v819 = vand.u32 %v818, 4294901760
    %v820 = vsub.f32 %v818, %v819
    %v821 = vand.u32 %v820, 4294901760
    %822 = vmatpush1.msra.mxu0 %v821
    %823 = vmatprep.subr.mxu0 0.0
    %v824 = vand.u32 %v54, 4294901760
    %v825 = vsub.f32 %v54, %v824
    %v826 = vand.u32 %v825, 4294901760
    %v827 = vsub.f32 %v825, %v826
    %v828 = vand.u32 %v827, 4294901760
    %829 = vmatpush1.msra.mxu0 %v828
    %830 = vmatprep.subr.mxu0 0.0
    %v831 = vand.u32 %v55, 4294901760
    %v832 = vsub.f32 %v55, %v831
    %v833 = vand.u32 %v832, 4294901760
    %v834 = vsub.f32 %v832, %v833
    %v835 = vand.u32 %v834, 4294901760
    %836 = vmatpush1.msra.mxu0 %v835
    %837 = vmatprep.subr.mxu0 0.0
    %v838 = vand.u32 %v56, 4294901760
    %v839 = vsub.f32 %v56, %v838
    %v840 = vand.u32 %v839, 4294901760
    %v841 = vsub.f32 %v839, %v840
    %v842 = vand.u32 %v841, 4294901760
    %843 = vmatpush1.msra.mxu0 %v842
    %844 = vmatprep.subr.mxu0 0.0
    %v845 = vand.u32 %v57, 4294901760
    %v846 = vsub.f32 %v57, %v845
    %v847 = vand.u32 %v846, 4294901760
    %v848 = vsub.f32 %v846, %v847
    %v849 = vand.u32 %v848, 4294901760
    %850 = vmatpush1.msra.mxu0 %v849
    %851 = vmatprep.subr.mxu0 0.0
    %852 = vmatpush1.msra.mxu0 0.0
    %853 = vmatprep.subr.mxu0 0.0
    %854 = vmatpush1.msra.mxu0 0.0
    %855 = vmatprep.subr.mxu0 0.0
    %856 = vmatpush1.msra.mxu0 0.0
    %857 = vmatprep.subr.mxu0 0.0
    %858 = vmatpush1.msra.mxu0 0.0
    %859 = vmatprep.subr.mxu0 0.0
    %860 = vmatpush1.msra.mxu0 0.0
    %861 = vmatprep.subr.mxu0 0.0
    %862 = vmatpush1.msra.mxu0 0.0
    %863 = vmatprep.subr.mxu0 0.0
    %864 = vmatpush1.msra.mxu0 0.0
    %865 = vmatprep.subr.mxu0 0.0
    %866 = vmatpush1.msra.mxu0 0.0
    %867 = vmatprep.subr.mxu0 0.0
    %868 = vmatpush1.msra.mxu0 0.0
    %869 = vmatprep.subr.mxu0 0.0
    %870 = vmatpush1.msra.mxu0 0.0
    %871 = vmatprep.subr.mxu0 0.0
    %872 = vmatpush1.msra.mxu0 0.0
    %873 = vmatprep.subr.mxu0 0.0
    %874 = vmatpush1.msra.mxu0 0.0
    %875 = vmatprep.subr.mxu0 0.0
    %876 = vmatpush1.msra.mxu0 0.0
    %877 = vmatprep.subr.mxu0 0.0
    %878 = vmatpush1.msra.mxu0 0.0
    %879 = vmatprep.subr.mxu0 0.0
    %880 = vmatpush1.msra.mxu0 0.0
    %881 = vmatprep.subr.mxu0 0.0
    %882 = vmatpush1.msra.mxu0 0.0
    %883 = vmatprep.subr.mxu0 0.0
    %884 = vmatpush1.msra.mxu0 0.0
    %885 = vmatprep.subr.mxu0 0.0
    %886 = vmatpush1.msra.mxu0 0.0
    %887 = vmatprep.subr.mxu0 0.0
    %888 = vmatpush1.msra.mxu0 0.0
    %889 = vmatprep.subr.mxu0 0.0
    %890 = vmatpush1.msra.mxu0 0.0
    %891 = vmatprep.subr.mxu0 0.0
    %892 = vmatpush1.msra.mxu0 0.0
    %893 = vmatprep.subr.mxu0 0.0
    %894 = vmatpush1.msra.mxu0 0.0
    %895 = vmatprep.subr.mxu0 0.0
    %896 = vmatpush1.msra.mxu0 0.0
    %897 = vmatprep.subr.mxu0 0.0
    %898 = vmatpush1.msra.mxu0 0.0
    %899 = vmatprep.mubr.f32.mxu0 0.0
    %v900 = vand.u32 %v710, 4294901760
    %901 = vmatmul.mubr.f32.gmra.mrb[0].mxu0 %v900
    %v902 = vpop.f32.mrb[0].mxu0
    %v903 = vadd.f32 %v792, %v902
    %v904 = vpop.f32.mrb[0].mxu0
    %905 = vdwg.mxu0
    %906 = vmatprep.subr.mxu0 0.0
    %v907 = vand.u32 %v50, 4294901760
    %v908 = vsub.f32 %v50, %v907
    %909 = vmatpush1.msra.mxu0 %v908
    %910 = vmatprep.subr.mxu0 0.0
    %v911 = vand.u32 %v51, 4294901760
    %v912 = vsub.f32 %v51, %v911
    %913 = vmatpush1.msra.mxu0 %v912
    %914 = vmatprep.subr.mxu0 0.0
    %v915 = vand.u32 %v52, 4294901760
    %v916 = vsub.f32 %v52, %v915
    %917 = vmatpush1.msra.mxu0 %v916
    %918 = vmatprep.subr.mxu0 0.0
    %v919 = vand.u32 %v53, 4294901760
    %v920 = vsub.f32 %v53, %v919
    %921 = vmatpush1.msra.mxu0 %v920
    %922 = vmatprep.subr.mxu0 0.0
    %v923 = vand.u32 %v54, 4294901760
    %v924 = vsub.f32 %v54, %v923
    %925 = vmatpush1.msra.mxu0 %v924
    %926 = vmatprep.subr.mxu0 0.0
    %v927 = vand.u32 %v55, 4294901760
    %v928 = vsub.f32 %v55, %v927
    %929 = vmatpush1.msra.mxu0 %v928
    %930 = vmatprep.subr.mxu0 0.0
    %v931 = vand.u32 %v56, 4294901760
    %v932 = vsub.f32 %v56, %v931
    %933 = vmatpush1.msra.mxu0 %v932
    %934 = vmatprep.subr.mxu0 0.0
    %v935 = vand.u32 %v57, 4294901760
    %v936 = vsub.f32 %v57, %v935
    %937 = vmatpush1.msra.mxu0 %v936
    %938 = vmatprep.subr.mxu0 0.0
    %939 = vmatpush1.msra.mxu0 0.0
    %940 = vmatprep.subr.mxu0 0.0
    %941 = vmatpush1.msra.mxu0 0.0
    %942 = vmatprep.subr.mxu0 0.0
    %943 = vmatpush1.msra.mxu0 0.0
    %944 = vmatprep.subr.mxu0 0.0
    %945 = vmatpush1.msra.mxu0 0.0
    %946 = vmatprep.subr.mxu0 0.0
    %947 = vmatpush1.msra.mxu0 0.0
    %948 = vmatprep.subr.mxu0 0.0
    %949 = vmatpush1.msra.mxu0 0.0
    %950 = vmatprep.subr.mxu0 0.0
    %951 = vmatpush1.msra.mxu0 0.0
    %952 = vmatprep.subr.mxu0 0.0
    %953 = vmatpush1.msra.mxu0 0.0
    %954 = vmatprep.subr.mxu0 0.0
    %955 = vmatpush1.msra.mxu0 0.0
    %956 = vmatprep.subr.mxu0 0.0
    %957 = vmatpush1.msra.mxu0 0.0
    %958 = vmatprep.subr.mxu0 0.0
    %959 = vmatpush1.msra.mxu0 0.0
    %960 = vmatprep.subr.mxu0 0.0
    %961 = vmatpush1.msra.mxu0 0.0
    %962 = vmatprep.subr.mxu0 0.0
    %963 = vmatpush1.msra.mxu0 0.0
    %964 = vmatprep.subr.mxu0 0.0
    %965 = vmatpush1.msra.mxu0 0.0
    %966 = vmatprep.subr.mxu0 0.0
    %967 = vmatpush1.msra.mxu0 0.0
    %968 = vmatprep.subr.mxu0 0.0
    %969 = vmatpush1.msra.mxu0 0.0
    %970 = vmatprep.subr.mxu0 0.0
    %971 = vmatpush1.msra.mxu0 0.0
    %972 = vmatprep.subr.mxu0 0.0
    %973 = vmatpush1.msra.mxu0 0.0
    %974 = vmatprep.subr.mxu0 0.0
    %975 = vmatpush1.msra.mxu0 0.0
    %976 = vmatprep.subr.mxu0 0.0
    %977 = vmatpush1.msra.mxu0 0.0
    %978 = vmatprep.subr.mxu0 0.0
    %979 = vmatpush1.msra.mxu0 0.0
    %980 = vmatprep.subr.mxu0 0.0
    %981 = vmatpush1.msra.mxu0 0.0
    %982 = vmatprep.subr.mxu0 0.0
    %983 = vmatpush1.msra.mxu0 0.0
    %984 = vmatprep.subr.mxu0 0.0
    %985 = vmatpush1.msra.mxu0 0.0
    %986 = vmatprep.mubr.f32.mxu0 0.0
    %v987 = vand.u32 %v710, 4294901760
    %v988 = vsub.f32 %v710, %v987
    %989 = vmatmul.mubr.f32.gmra.mrb[0].mxu0 %v988
    %v990 = vpop.f32.mrb[0].mxu0
    %v991 = vadd.f32 %v903, %v990
    %v992 = vpop.f32.mrb[0].mxu0
    %993 = vdwg.mxu0
    %994 = vmatprep.subr.mxu0 0.0
    %v995 = vand.u32 %v50, 4294901760
    %996 = vmatpush1.msra.mxu0 %v995
    %997 = vmatprep.subr.mxu0 0.0
    %v998 = vand.u32 %v51, 4294901760
    %999 = vmatpush1.msra.mxu0 %v998
    %1000 = vmatprep.subr.mxu0 0.0
    %v1001 = vand.u32 %v52, 4294901760
    %1002 = vmatpush1.msra.mxu0 %v1001
    %1003 = vmatprep.subr.mxu0 0.0
    %v1004 = vand.u32 %v53, 4294901760
    %1005 = vmatpush1.msra.mxu0 %v1004
    %1006 = vmatprep.subr.mxu0 0.0
    %v1007 = vand.u32 %v54, 4294901760
    %1008 = vmatpush1.msra.mxu0 %v1007
    %1009 = vmatprep.subr.mxu0 0.0
    %v1010 = vand.u32 %v55, 4294901760
    %1011 = vmatpush1.msra.mxu0 %v1010
    %1012 = vmatprep.subr.mxu0 0.0
    %v1013 = vand.u32 %v56, 4294901760
    %1014 = vmatpush1.msra.mxu0 %v1013
    %1015 = vmatprep.subr.mxu0 0.0
    %v1016 = vand.u32 %v57, 4294901760
    %1017 = vmatpush1.msra.mxu0 %v1016
    %1018 = vmatprep.subr.mxu0 0.0
    %1019 = vmatpush1.msra.mxu0 0.0
    %1020 = vmatprep.subr.mxu0 0.0
    %1021 = vmatpush1.msra.mxu0 0.0
    %1022 = vmatprep.subr.mxu0 0.0
    %1023 = vmatpush1.msra.mxu0 0.0
    %1024 = vmatprep.subr.mxu0 0.0
    %1025 = vmatpush1.msra.mxu0 0.0
    %1026 = vmatprep.subr.mxu0 0.0
    %1027 = vmatpush1.msra.mxu0 0.0
    %1028 = vmatprep.subr.mxu0 0.0
    %1029 = vmatpush1.msra.mxu0 0.0
    %1030 = vmatprep.subr.mxu0 0.0
    %1031 = vmatpush1.msra.mxu0 0.0
    %1032 = vmatprep.subr.mxu0 0.0
    %1033 = vmatpush1.msra.mxu0 0.0
    %1034 = vmatprep.subr.mxu0 0.0
    %1035 = vmatpush1.msra.mxu0 0.0
    %1036 = vmatprep.subr.mxu0 0.0
    %1037 = vmatpush1.msra.mxu0 0.0
    %1038 = vmatprep.subr.mxu0 0.0
    %1039 = vmatpush1.msra.mxu0 0.0
    %1040 = vmatprep.subr.mxu0 0.0
    %1041 = vmatpush1.msra.mxu0 0.0
    %1042 = vmatprep.subr.mxu0 0.0
    %1043 = vmatpush1.msra.mxu0 0.0
    %1044 = vmatprep.subr.mxu0 0.0
    %1045 = vmatpush1.msra.mxu0 0.0
    %1046 = vmatprep.subr.mxu0 0.0
    %1047 = vmatpush1.msra.mxu0 0.0
    %1048 = vmatprep.subr.mxu0 0.0
    %1049 = vmatpush1.msra.mxu0 0.0
    %1050 = vmatprep.subr.mxu0 0.0
    %1051 = vmatpush1.msra.mxu0 0.0
    %1052 = vmatprep.subr.mxu0 0.0
    %1053 = vmatpush1.msra.mxu0 0.0
    %1054 = vmatprep.subr.mxu0 0.0
    %1055 = vmatpush1.msra.mxu0 0.0
    %1056 = vmatprep.subr.mxu0 0.0
    %1057 = vmatpush1.msra.mxu0 0.0
    %1058 = vmatprep.subr.mxu0 0.0
    %1059 = vmatpush1.msra.mxu0 0.0
    %1060 = vmatprep.subr.mxu0 0.0
    %1061 = vmatpush1.msra.mxu0 0.0
    %1062 = vmatprep.subr.mxu0 0.0
    %1063 = vmatpush1.msra.mxu0 0.0
    %1064 = vmatprep.subr.mxu0 0.0
    %1065 = vmatpush1.msra.mxu0 0.0
    %1066 = vmatprep.mubr.f32.mxu0 0.0
    %v1067 = vand.u32 %v710, 4294901760
    %v1068 = vsub.f32 %v710, %v1067
    %v1069 = vand.u32 %v1068, 4294901760
    %1070 = vmatmul.mubr.f32.gmra.mrb[0].mxu0 %v1069
    %v1071 = vpop.f32.mrb[0].mxu0
    %v1072 = vadd.f32 %v991, %v1071
    %v1073 = vpop.f32.mrb[0].mxu0
    %1074 = vdwg.mxu0
    %1075 = vmatprep.subr.mxu0 0.0
    %v1076 = vand.u32 %v50, 4294901760
    %v1077 = vsub.f32 %v50, %v1076
    %v1078 = vand.u32 %v1077, 4294901760
    %1079 = vmatpush1.msra.mxu0 %v1078
    %1080 = vmatprep.subr.mxu0 0.0
    %v1081 = vand.u32 %v51, 4294901760
    %v1082 = vsub.f32 %v51, %v1081
    %v1083 = vand.u32 %v1082, 4294901760
    %1084 = vmatpush1.msra.mxu0 %v1083
    %1085 = vmatprep.subr.mxu0 0.0
    %v1086 = vand.u32 %v52, 4294901760
    %v1087 = vsub.f32 %v52, %v1086
    %v1088 = vand.u32 %v1087, 4294901760
    %1089 = vmatpush1.msra.mxu0 %v1088
    %1090 = vmatprep.subr.mxu0 0.0
    %v1091 = vand.u32 %v53, 4294901760
    %v1092 = vsub.f32 %v53, %v1091
    %v1093 = vand.u32 %v1092, 4294901760
    %1094 = vmatpush1.msra.mxu0 %v1093
    %1095 = vmatprep.subr.mxu0 0.0
    %v1096 = vand.u32 %v54, 4294901760
    %v1097 = vsub.f32 %v54, %v1096
    %v1098 = vand.u32 %v1097, 4294901760
    %1099 = vmatpush1.msra.mxu0 %v1098
    %1100 = vmatprep.subr.mxu0 0.0
    %v1101 = vand.u32 %v55, 4294901760
    %v1102 = vsub.f32 %v55, %v1101
    %v1103 = vand.u32 %v1102, 4294901760
    %1104 = vmatpush1.msra.mxu0 %v1103
    %1105 = vmatprep.subr.mxu0 0.0
    %v1106 = vand.u32 %v56, 4294901760
    %v1107 = vsub.f32 %v56, %v1106
    %v1108 = vand.u32 %v1107, 4294901760
    %1109 = vmatpush1.msra.mxu0 %v1108
    %1110 = vmatprep.subr.mxu0 0.0
    %v1111 = vand.u32 %v57, 4294901760
    %v1112 = vsub.f32 %v57, %v1111
    %v1113 = vand.u32 %v1112, 4294901760
    %1114 = vmatpush1.msra.mxu0 %v1113
    %1115 = vmatprep.subr.mxu0 0.0
    %1116 = vmatpush1.msra.mxu0 0.0
    %1117 = vmatprep.subr.mxu0 0.0
    %1118 = vmatpush1.msra.mxu0 0.0
    %1119 = vmatprep.subr.mxu0 0.0
    %1120 = vmatpush1.msra.mxu0 0.0
    %1121 = vmatprep.subr.mxu0 0.0
    %1122 = vmatpush1.msra.mxu0 0.0
    %1123 = vmatprep.subr.mxu0 0.0
    %1124 = vmatpush1.msra.mxu0 0.0
    %1125 = vmatprep.subr.mxu0 0.0
    %1126 = vmatpush1.msra.mxu0 0.0
    %1127 = vmatprep.subr.mxu0 0.0
    %1128 = vmatpush1.msra.mxu0 0.0
    %1129 = vmatprep.subr.mxu0 0.0
    %1130 = vmatpush1.msra.mxu0 0.0
    %1131 = vmatprep.subr.mxu0 0.0
    %1132 = vmatpush1.msra.mxu0 0.0
    %1133 = vmatprep.subr.mxu0 0.0
    %1134 = vmatpush1.msra.mxu0 0.0
    %1135 = vmatprep.subr.mxu0 0.0
    %1136 = vmatpush1.msra.mxu0 0.0
    %1137 = vmatprep.subr.mxu0 0.0
    %1138 = vmatpush1.msra.mxu0 0.0
    %1139 = vmatprep.subr.mxu0 0.0
    %1140 = vmatpush1.msra.mxu0 0.0
    %1141 = vmatprep.subr.mxu0 0.0
    %1142 = vmatpush1.msra.mxu0 0.0
    %1143 = vmatprep.subr.mxu0 0.0
    %1144 = vmatpush1.msra.mxu0 0.0
    %1145 = vmatprep.subr.mxu0 0.0
    %1146 = vmatpush1.msra.mxu0 0.0
    %1147 = vmatprep.subr.mxu0 0.0
    %1148 = vmatpush1.msra.mxu0 0.0
    %1149 = vmatprep.subr.mxu0 0.0
    %1150 = vmatpush1.msra.mxu0 0.0
    %1151 = vmatprep.subr.mxu0 0.0
    %1152 = vmatpush1.msra.mxu0 0.0
    %1153 = vmatprep.subr.mxu0 0.0
    %1154 = vmatpush1.msra.mxu0 0.0
    %1155 = vmatprep.subr.mxu0 0.0
    %1156 = vmatpush1.msra.mxu0 0.0
    %1157 = vmatprep.subr.mxu0 0.0
    %1158 = vmatpush1.msra.mxu0 0.0
    %1159 = vmatprep.subr.mxu0 0.0
    %1160 = vmatpush1.msra.mxu0 0.0
    %1161 = vmatprep.subr.mxu0 0.0
    %1162 = vmatpush1.msra.mxu0 0.0
    %1163 = vmatprep.mubr.f32.mxu0 0.0
    %v1164 = vand.u32 %v710, 4294901760
    %1165 = vmatmul.mubr.f32.gmra.mrb[0].mxu0 %v1164
    %v1166 = vpop.f32.mrb[0].mxu0
    %v1167 = vadd.f32 %v1072, %v1166
    %v1168 = vpop.f32.mrb[0].mxu0
    %1169 = vdwg.mxu0
    %1170 = vmatprep.subr.mxu0 0.0
    %v1171 = vand.u32 %v50, 4294901760
    %1172 = vmatpush1.msra.mxu0 %v1171
    %1173 = vmatprep.subr.mxu0 0.0
    %v1174 = vand.u32 %v51, 4294901760
    %1175 = vmatpush1.msra.mxu0 %v1174
    %1176 = vmatprep.subr.mxu0 0.0
    %v1177 = vand.u32 %v52, 4294901760
    %1178 = vmatpush1.msra.mxu0 %v1177
    %1179 = vmatprep.subr.mxu0 0.0
    %v1180 = vand.u32 %v53, 4294901760
    %1181 = vmatpush1.msra.mxu0 %v1180
    %1182 = vmatprep.subr.mxu0 0.0
    %v1183 = vand.u32 %v54, 4294901760
    %1184 = vmatpush1.msra.mxu0 %v1183
    %1185 = vmatprep.subr.mxu0 0.0
    %v1186 = vand.u32 %v55, 4294901760
    %1187 = vmatpush1.msra.mxu0 %v1186
    %1188 = vmatprep.subr.mxu0 0.0
    %v1189 = vand.u32 %v56, 4294901760
    %1190 = vmatpush1.msra.mxu0 %v1189
    %1191 = vmatprep.subr.mxu0 0.0
    %v1192 = vand.u32 %v57, 4294901760
    %1193 = vmatpush1.msra.mxu0 %v1192
    %1194 = vmatprep.subr.mxu0 0.0
    %1195 = vmatpush1.msra.mxu0 0.0
    %1196 = vmatprep.subr.mxu0 0.0
    %1197 = vmatpush1.msra.mxu0 0.0
    %1198 = vmatprep.subr.mxu0 0.0
    %1199 = vmatpush1.msra.mxu0 0.0
    %1200 = vmatprep.subr.mxu0 0.0
    %1201 = vmatpush1.msra.mxu0 0.0
    %1202 = vmatprep.subr.mxu0 0.0
    %1203 = vmatpush1.msra.mxu0 0.0
    %1204 = vmatprep.subr.mxu0 0.0
    %1205 = vmatpush1.msra.mxu0 0.0
    %1206 = vmatprep.subr.mxu0 0.0
    %1207 = vmatpush1.msra.mxu0 0.0
    %1208 = vmatprep.subr.mxu0 0.0
    %1209 = vmatpush1.msra.mxu0 0.0
    %1210 = vmatprep.subr.mxu0 0.0
    %1211 = vmatpush1.msra.mxu0 0.0
    %1212 = vmatprep.subr.mxu0 0.0
    %1213 = vmatpush1.msra.mxu0 0.0
    %1214 = vmatprep.subr.mxu0 0.0
    %1215 = vmatpush1.msra.mxu0 0.0
    %1216 = vmatprep.subr.mxu0 0.0
    %1217 = vmatpush1.msra.mxu0 0.0
    %1218 = vmatprep.subr.mxu0 0.0
    %1219 = vmatpush1.msra.mxu0 0.0
    %1220 = vmatprep.subr.mxu0 0.0
    %1221 = vmatpush1.msra.mxu0 0.0
    %1222 = vmatprep.subr.mxu0 0.0
    %1223 = vmatpush1.msra.mxu0 0.0
    %1224 = vmatprep.subr.mxu0 0.0
    %1225 = vmatpush1.msra.mxu0 0.0
    %1226 = vmatprep.subr.mxu0 0.0
    %1227 = vmatpush1.msra.mxu0 0.0
    %1228 = vmatprep.subr.mxu0 0.0
    %1229 = vmatpush1.msra.mxu0 0.0
    %1230 = vmatprep.subr.mxu0 0.0
    %1231 = vmatpush1.msra.mxu0 0.0
    %1232 = vmatprep.subr.mxu0 0.0
    %1233 = vmatpush1.msra.mxu0 0.0
    %1234 = vmatprep.subr.mxu0 0.0
    %1235 = vmatpush1.msra.mxu0 0.0
    %1236 = vmatprep.subr.mxu0 0.0
    %1237 = vmatpush1.msra.mxu0 0.0
    %1238 = vmatprep.subr.mxu0 0.0
    %1239 = vmatpush1.msra.mxu0 0.0
    %1240 = vmatprep.subr.mxu0 0.0
    %1241 = vmatpush1.msra.mxu0 0.0
    %1242 = vmatprep.mubr.f32.mxu0 0.0
    %v1243 = vand.u32 %v710, 4294901760
    %1244 = vmatmul.mubr.f32.gmra.mrb[0].mxu0 %v1243
    %v1245 = vpop.f32.mrb[0].mxu0
    %v1246 = vadd.f32 %v1167, %v1245
    %v1247 = vpop.f32.mrb[0].mxu0
    %1248 = vdwg.mxu0
    %vm1249 = vcmask 64512
    %1250 = vst.msk [vmem:[#allocation5] sm:$0xff] %vm1249, %v1246
    // Predicated region
    $region22: #{charge.1} parent=1 // pred_check
      _
    $region23: #{charge.1} parent=1 // pred_check_branch
      %1252 = sbr.rel (0) target = $region25
    $region24: #{charge.1} parent=1 // pred_region
      %s1254 = ssub.s32 128, 128
      %1255 = vsyncadd [#allocation4], %s1254
      %s1257 = sshll.u32 [#allocation5], 4
      %s1258 = int_to_ptr.vmem [resolvable:$true] %s1257
      %1260 = dma.vmem_to_hbm [thread:$0]  %s1258, 128, %s4, [#allocation4]
    $region25: #{charge.1} parent=1 // pred_fallthru
      _
    // Predicated region
    $region26: #{charge.1} parent=1 // pred_check
      _
    $region27: #{charge.1} parent=1 // pred_check_branch
      %1262 = sbr.rel (0) target = $region29
    $region28: #{charge.1} parent=1 // pred_region
      %1263 = dma.done [#allocation4], 128
    $region29: #{charge.1} parent=1 // pred_fallthru
      _
    %1264 = vsyncpa [#allocation3], 1
    %1265 = vsyncpa [#allocation4], 1

</llo_original>
